<compile_context>
chip_gen: v6e
topology: v6e:2x2x1
jax: 0.10.0
libtpu: 0.0.40
codegen_flags: <defaults>
</compile_context>

<pallas_src>
import functools

import jax
import jax.numpy as jnp
from jax.experimental import pallas as pl
from jax.experimental.pallas import tpu as pltpu

_S_TILE_MAX = 2048          # lane-axis tile cap (multiple of 128)
_ROW_TILE_CAP = 1024        # sublane-axis tile cap (multiple of 8)
_BLOCK_BUDGET_BYTES = 4 * 1024 * 1024   # per input block (Pallas double-buffers it)


def _choose_tiles(rows: int, s: int, itemsize: int):
    """Pick (row_tile, s_tile): big blocks, (8,128)-legal, bounded VMEM."""
    s_tile = s if s <= _S_TILE_MAX else _S_TILE_MAX
    # Rows per block so that row_tile * s_tile * itemsize ~= _BLOCK_BUDGET_BYTES.
    row_budget = _BLOCK_BUDGET_BYTES // max(1, s_tile * itemsize)
    row_budget = max(8, (row_budget // 8) * 8)
    row_budget = min(row_budget, _ROW_TILE_CAP)
    row_tile = rows if rows <= row_budget else row_budget
    return row_tile, s_tile


def _gap_kernel(x_ref, o_ref, acc_ref, *, total_s, s_tile, inv_s, needs_mask):
    # x_ref:   (row_tile, s_tile) input chunk (auto double-buffered)
    # o_ref:   (row_tile, 1) output block (same block across k -> resident target)
    # acc_ref: (row_tile, 1) f32 VMEM scratch accumulator
    k = pl.program_id(1)
    nk = pl.num_programs(1)

    @pl.when(k == 0)
    def _():
        acc_ref[...] = jnp.zeros_like(acc_ref)

    x = x_ref[...]
    if needs_mask:
        # Last spatial chunk may run past S; zero the out-of-bounds lanes.
        col = jax.lax.broadcasted_iota(jnp.int32, x.shape, dimension=1) + k * s_tile
        x = jnp.where(col < total_s, x, jnp.zeros_like(x))

    # Per-chunk f32 accumulation: keeps precision, lane-reduce goes to the XLU
    # (a free slot here — the kernel is HBM-bound).
    acc_ref[...] += jnp.sum(x.astype(jnp.float32), axis=-1, keepdims=True)

    @pl.when(k == nk - 1)
    def _():
        o_ref[...] = (acc_ref[...] * inv_s).astype(o_ref.dtype)


@functools.partial(jax.jit, static_argnames=("spatial_dims", "keepdim"))
def global_average_pooling(x, *, spatial_dims: int, keepdim: bool = False):
    """Equivalent of GlobalAveragePooling(spatial_dims, keepdim)(x) for (N, C, *spatial)."""
    assert x.ndim == 2 + spatial_dims, "expected (N, C, *spatial) input"
    n, c = x.shape[0], x.shape[1]
    s = 1
    for d in x.shape[2:]:
        s *= d

    rows = n * c
    # Glue reshape in plain JAX (no data movement for a contiguous input).
    x2 = x.reshape(rows, s)

    itemsize = jnp.dtype(x.dtype).itemsize
    row_tile, s_tile = _choose_tiles(rows, s, itemsize)
    grid = (pl.cdiv(rows, row_tile), pl.cdiv(s, s_tile))
    needs_mask = (s % s_tile) != 0

    kernel = functools.partial(
        _gap_kernel, total_s=s, s_tile=s_tile, inv_s=1.0 / s, needs_mask=needs_mask
    )

    cost = pl.CostEstimate(
        flops=rows * s,
        transcendentals=0,
        bytes_accessed=rows * s * itemsize + rows * itemsize,
    )

    pooled = pl.pallas_call(
        kernel,
        out_shape=jax.ShapeDtypeStruct((rows, 1), x.dtype),
        grid_spec=pltpu.PrefetchScalarGridSpec(
            num_scalar_prefetch=0,
            grid=grid,
            in_specs=[pl.BlockSpec((row_tile, s_tile), lambda i, k: (i, k))],
            out_specs=pl.BlockSpec((row_tile, 1), lambda i, k: (i, 0)),
            scratch_shapes=[pltpu.VMEM((row_tile, 1), jnp.float32)],
        ),
        compiler_params=pltpu.CompilerParams(
            dimension_semantics=("parallel", "arbitrary"),
        ),
        cost_estimate=cost,
    )(x2)  # (rows, 1)

    if keepdim:
        # nn.AdaptiveAvgPoolNd(1) keeps each spatial dim as size 1.
        return pooled.reshape((n, c) + (1,) * spatial_dims)
    # flatten(start_dim=1) on (N, C, 1, ..., 1) -> (N, C)
    return pooled.reshape(n, c)


if __name__ == "__main__":
    key = jax.random.PRNGKey(0)

    # spatial_dims=2 example: NCHW input
    x = jax.random.normal(key, (2, 4, 16, 16), dtype=jnp.float32)

    out = global_average_pooling(x, spatial_dims=2, keepdim=False)
    out = jax.block_until_ready(out)
    assert out.shape == (2, 4), out.shape

    out_keep = global_average_pooling(x, spatial_dims=2, keepdim=True)
    out_keep = jax.block_until_ready(out_keep)
    assert out_keep.shape == (2, 4, 1, 1), out_keep.shape

    ref = jnp.mean(x, axis=(2, 3))
    assert jnp.allclose(out, ref, atol=1e-5, rtol=1e-5)
    assert jnp.allclose(out_keep.reshape(2, 4), ref, atol=1e-5, rtol=1e-5)

    # spatial_dims=1 example: NCL input
    x1 = jax.random.normal(jax.random.PRNGKey(1), (2, 4, 32), dtype=jnp.float32)
    out1 = jax.block_until_ready(global_average_pooling(x1, spatial_dims=1))
    assert out1.shape == (2, 4)
    assert jnp.allclose(out1, jnp.mean(x1, axis=2), atol=1e-5, rtol=1e-5)

    # spatial_dims=3 example: NCDHW input
    x3 = jax.random.normal(jax.random.PRNGKey(2), (2, 4, 4, 8, 8), dtype=jnp.float32)
    out3 = jax.block_until_ready(global_average_pooling(x3, spatial_dims=3, keepdim=True))
    assert out3.shape == (2, 4, 1, 1, 1)
    assert jnp.allclose(out3.reshape(2, 4), jnp.mean(x3, axis=(2, 3, 4)), atol=1e-5, rtol=1e-5)

    # Larger / non-aligned shape exercising masking + multi-block rows (bf16 path).
    xb = jax.random.normal(jax.random.PRNGKey(3), (4, 96, 33, 71), dtype=jnp.bfloat16)
    outb = jax.block_until_ready(global_average_pooling(xb, spatial_dims=2))
    refb = jnp.mean(xb.astype(jnp.float32), axis=(2, 3))
    assert outb.shape == (4, 96)
    assert jnp.allclose(outb.astype(jnp.float32), refb, atol=2e-2, rtol=2e-2)

    print("KERNEL_OK")
</pallas_src>

<mosaic_0001>
module attributes {stable_mosaic.version = 11 : i64} {
  func.func @_gap_kernel(%arg0: i32, %arg1: i32, %arg2: memref<8x256xf32, #tpu.memory_space<vmem>>, %arg3: memref<8x1xf32, #tpu.memory_space<vmem>>, %arg4: memref<8x1xf32, #tpu.memory_space<vmem>>) attributes {dimension_semantics = [#tpu.dimension_semantics<parallel>, #tpu.dimension_semantics<arbitrary>], iteration_bounds = array<i64: 1, 1>, scalar_prefetch = 0 : i64, scratch_operands = 1 : i64, tpu.core_type = #tpu.core_type<tc>, window_params = [{transform_indices = @transform_0, window_bounds = array<i64: 8, 256>}, {transform_indices = @transform_1, window_bounds = array<i64: 8, 1>}]} {
    %c0_i32 = arith.constant 0 : i32
    %0 = arith.cmpi eq, %arg1, %c0_i32 : i32
    %1 = arith.extui %0 : i1 to i32
    %c0_i32_0 = arith.constant 0 : i32
    %2 = arith.cmpi ne, %1, %c0_i32_0 : i32
    scf.if %2 {
      %cst_8 = arith.constant 0.000000e+00 : f32
      %12 = vector.broadcast %cst_8 : f32 to vector<8x1xf32>
      %c0_9 = arith.constant 0 : index
      %c0_10 = arith.constant 0 : index
      %13 = vector.load %arg4[%c0_9, %c0_10] : memref<8x1xf32, #tpu.memory_space<vmem>>, vector<8x1xf32>
      tpu.vector_store %arg4[%c0_9, %c0_10], %12 {strides = array<i32>} : memref<8x1xf32, #tpu.memory_space<vmem>>, vector<8x1xf32>,
    } else {
    }
    %c0 = arith.constant 0 : index
    %c0_1 = arith.constant 0 : index
    %3 = vector.load %arg2[%c0, %c0_1] : memref<8x256xf32, #tpu.memory_space<vmem>>, vector<8x256xf32>
    %c0_2 = arith.constant 0 : index
    %c0_3 = arith.constant 0 : index
    %4 = vector.load %arg4[%c0_2, %c0_3] : memref<8x1xf32, #tpu.memory_space<vmem>>, vector<8x1xf32>
    %cst = arith.constant dense<0.000000e+00> : vector<8xf32>
    %5 = vector.multi_reduction <add>, %3, %cst [1] : vector<8x256xf32> to vector<8xf32>
    %6 = vector.shape_cast %5 : vector<8xf32> to vector<8x1xf32>
    %7 = arith.addf %4, %6 : vector<8x1xf32>
    %c0_4 = arith.constant 0 : index
    %c0_5 = arith.constant 0 : index
    %8 = vector.load %arg4[%c0_4, %c0_5] : memref<8x1xf32, #tpu.memory_space<vmem>>, vector<8x1xf32>
    tpu.vector_store %arg4[%c0_4, %c0_5], %7 {strides = array<i32>} : memref<8x1xf32, #tpu.memory_space<vmem>>, vector<8x1xf32>,
    %c0_i32_6 = arith.constant 0 : i32
    %9 = arith.cmpi eq, %arg1, %c0_i32_6 : i32
    %10 = arith.extui %9 : i1 to i32
    %c0_i32_7 = arith.constant 0 : i32
    %11 = arith.cmpi ne, %10, %c0_i32_7 : i32
    scf.if %11 {
      %c0_8 = arith.constant 0 : index
      %c0_9 = arith.constant 0 : index
      %12 = vector.load %arg4[%c0_8, %c0_9] : memref<8x1xf32, #tpu.memory_space<vmem>>, vector<8x1xf32>
      %cst_10 = arith.constant 3.906250e-03 : f32
      %13 = vector.broadcast %cst_10 : f32 to vector<8x1xf32>
      %14 = arith.mulf %12, %13 : vector<8x1xf32>
      %c0_11 = arith.constant 0 : index
      %c0_12 = arith.constant 0 : index
      %15 = vector.load %arg3[%c0_11, %c0_12] : memref<8x1xf32, #tpu.memory_space<vmem>>, vector<8x1xf32>
      tpu.vector_store %arg3[%c0_11, %c0_12], %14 {strides = array<i32>} : memref<8x1xf32, #tpu.memory_space<vmem>>, vector<8x1xf32>,
    } else {
    }
    return
  }
  func.func @transform_0(%arg0: i32, %arg1: i32) -> (i32, i32) {
    %c0_i32 = arith.constant 0 : i32
    return %arg0, %arg1 : i32, i32
  }
  func.func @transform_1(%arg0: i32, %arg1: i32) -> (i32, i32) {
    %c0_i32 = arith.constant 0 : i32
    %c0_i32_0 = arith.constant 0 : i32
    return %arg0, %c0_i32 : i32, i32
  }
}

</mosaic_0001>

<llo_original>
// kernel: global_average_pooling.1
$region0: #{global_average_pooling.1}
  #allocation0 [shape = 'u32[]', space=smem, size = 0x4, offset = 0x4, fixed_abs, tag = 'smem constant byte address 0x4 - core index']
  #allocation1 [shape = 'u32[144,128]{1,0:T(1,128)}', space=vmem, size = 0x12000, scoped, tag = 'internal scratch']
  #allocation2 [shape = 'f32[8,1]{1,0:T(8,128)}', space=vmem, size = 0x1000, scoped, tag = 'scratch operand']
  %s0 = inlined_call_operand.vmem [shape: f32[8,256], index: 0, kind: input, shape index: {}]
  %s1 = inlined_call_operand.vmem [shape: f32[8,1], index: 1, kind: output, shape index: {}]
  %s2 = sld [smem:[#allocation0]]
  $region22: #{global_average_pooling.1} parent=0
    _
  %s4 = ssub.s32 1, %s2
  %s5 = scalar_select 0, %s4, %s2
  // Predicated region
  $region2: #{global_average_pooling.1} parent=0 // pred_check
    _
  $region3: #{global_average_pooling.1} parent=0 // pred_check_branch
    %7 = sbr.rel (0) target = $region5
  $region4: #{global_average_pooling.1} parent=0 // pred_region
    _
  $region5: #{global_average_pooling.1} parent=0 // pred_fallthru
    _
  %p8 = scmp.eq.s32.totalorder 0, 0
  // Predicated region
  $region6: #{global_average_pooling.1} parent=0 // pred_check
    %p9 = pneg %p8
  $region7: #{global_average_pooling.1} parent=0 // pred_check_branch
    %11 = sbr.rel (%p9) target = $region9
  $region8: #{global_average_pooling.1} parent=0 // pred_region
    %vm12 = vcmask 7168
    %13 = vst.msk [vmem:[#allocation2] sm:$0xff] %vm12, 0.0
  $region9: #{global_average_pooling.1} parent=0 // pred_fallthru
    _
  %v14 = vld [vmem:[%s0] sm:$0xff]
  %v15 = vld [vmem:[%s0 + $0x8] sm:$0xff]
  %v16 = vld [vmem:[#allocation2] sm:$0xff]
  %v17 = vadd.f32 %v14, %v15
  %18 = vadd.xlane.f32.xlu0 %v17
  %v19 = vpop.xlane.xlu0 %18
  %v20 = vadd.f32 %v16, %v19
  %vm21 = vcmask 7168
  %22 = vst.msk [vmem:[#allocation2] sm:$0xff] %vm21, %v20
  // Predicated region
  $region10: #{global_average_pooling.1} parent=0 // pred_check
    %p23 = pneg %p8
  $region11: #{global_average_pooling.1} parent=0 // pred_check_branch
    %25 = sbr.rel (%p23) target = $region13
  $region12: #{global_average_pooling.1} parent=0 // pred_region
    %v26 = vld [vmem:[#allocation2] sm:$0xff]
    %v27 = vmul.f32 %v26, 0.00390625
    %28 = vst.msk [vmem:[%s1] sm:$0xff] %vm21, %v27
  $region13: #{global_average_pooling.1} parent=0 // pred_fallthru
    _
  // Predicated region
  $region14: #{global_average_pooling.1} parent=0 // pred_check
    _
  $region15: #{global_average_pooling.1} parent=0 // pred_check_branch
    %30 = sbr.rel (0) target = $region17
  $region16: #{global_average_pooling.1} parent=0 // pred_region
    _
  $region17: #{global_average_pooling.1} parent=0 // pred_fallthru
    _
  // Predicated region
  $region18: #{global_average_pooling.1} parent=0 // pred_check
    _
  $region19: #{global_average_pooling.1} parent=0 // pred_check_branch
    %32 = sbr.rel (0) target = $region21
  $region20: #{global_average_pooling.1} parent=0 // pred_region
    _
  $region21: #{global_average_pooling.1} parent=0 // pred_fallthru
    _

</llo_original>
